<compile_context>
chip_gen: v7x
topology: tpu7x:2x2x1
jax: 0.10.0
libtpu: 0.0.40
codegen_flags: <defaults>
</compile_context>

<pallas_src>
import functools

import numpy as np

import jax
import jax.numpy as jnp
from jax.experimental import pallas as pl
from jax.experimental.pallas import tpu as pltpu

EPS = 1e-5  # PyTorch BatchNorm2d default


# ----------------------------------------------------------------------------
# Fused kernel: 1x1 conv+BN+ReLU  ->  3x3 depthwise+BN  ->  1x1 conv+BN+ReLU
# ----------------------------------------------------------------------------
def _shufflenet_unit_kernel(x_ref, w1_ref, b1_ref, kdw_ref, b2_ref,
                            w3_ref, b3_ref, m_ref, o_ref, *, W):
    """One image per grid step, channels-first, spatial axis flattened.

    x_ref:   (1, Cin, P)   P = H*W (lane axis, dense)
    w1_ref:  (mid, Cin)    b1_ref: (mid, 1)
    kdw_ref: (9, mid, 1)   folded depthwise taps, tap index = dy*3+dx
    b2_ref:  (mid, 1)
    w3_ref:  (Cout, mid)   b3_ref: (Cout, 1)
    m_ref:   (4, 1, P)     [col-1 valid, col+1 valid, row-1 valid, row+1 valid]
    o_ref:   (1, Cout, P)
    """
    x = x_ref[0].astype(jnp.float32)                       # (Cin, P)
    P = x.shape[-1]

    # ---- 1x1 conv + BN + ReLU (MXU; output lane axis = P, dense) ----------
    y = jnp.dot(w1_ref[...].astype(jnp.float32), x,
                preferred_element_type=jnp.float32)        # (mid, P)
    y = jnp.maximum(y + b1_ref[...], 0.0)

    # ---- 3x3 depthwise conv (stride 1, pad 1) + BN (no ReLU) --------------
    # A spatial (dy, dx) tap is a cyclic rotation of the flat H*W lane axis;
    # wrapped / out-of-image positions are zeroed with the precomputed masks.
    # One-time rotation-direction probe keeps the math independent of the
    # hardware rotate convention.
    pidx = jax.lax.broadcasted_iota(jnp.int32, (1, P), 1)
    probe = pltpu.roll(pidx.astype(jnp.float32), shift=1, axis=1)
    prev = jnp.where(pidx == 0, P - 1, pidx - 1).astype(jnp.float32)
    fwd = probe == prev                                    # (1,P) all-True/all-False

    def shift(a, off):
        """a[:, p + off] with flat wrap (wrapped lanes masked later)."""
        off = off % P
        if off == 0:
            return a
        r_fwd = pltpu.roll(a, shift=(P - off) % P, axis=1)
        r_bwd = pltpu.roll(a, shift=off, axis=1)
        return jnp.where(fwd, r_fwd, r_bwd)

    # Separable 3x3: column shifts once, then per-row tap mix + row shifts.
    y_l = shift(y, -1) * m_ref[0]                          # y[r, c-1], zero at c=0
    y_r = shift(y, +1) * m_ref[1]                          # y[r, c+1], zero at c=W-1

    acc = jnp.zeros_like(y)
    for dy in range(3):
        c_dy = (kdw_ref[3 * dy + 0] * y_l                  # per-channel taps (mid,1)
                + kdw_ref[3 * dy + 1] * y
                + kdw_ref[3 * dy + 2] * y_r)               # (mid, P)
        if dy == 1:
            acc = acc + c_dy
        else:
            s = shift(c_dy, (dy - 1) * W)                  # row r+dy-1
            rmask = m_ref[2] if dy == 0 else m_ref[3]
            acc = acc + s * rmask
    z = acc + b2_ref[...]                                  # (mid, P)

    # ---- 1x1 conv + BN + ReLU ----------------------------------------------
    out = jnp.dot(w3_ref[...].astype(jnp.float32), z,
                  preferred_element_type=jnp.float32)      # (Cout, P)
    out = jnp.maximum(out + b3_ref[...], 0.0)
    # Outer self.relu(out) of the module is a no-op after this ReLU.
    o_ref[0] = out.astype(o_ref.dtype)


def _dw_masks(h, w):
    """0/1 masks (4, 1, H*W): [c-1 valid, c+1 valid, r-1 valid, r+1 valid]."""
    p = h * w
    rows, cols = np.divmod(np.arange(p), w)
    m = np.zeros((4, 1, p), np.float32)
    m[0, 0] = cols >= 1
    m[1, 0] = cols <= w - 2
    m[2, 0] = rows >= 1
    m[3, 0] = rows <= h - 2
    return m


# ----------------------------------------------------------------------------
# ShuffleNetUnit forward (stride = 1)
# ----------------------------------------------------------------------------
def shufflenet_unit_forward(x_nchw, params, stride=1):
    if stride == 2:
        # TODO(synk): the reference stride=2 path does
        #   torch.cat([x, branch_main(x)], dim=1) where x is HxW and the branch
        #   output is (H/2)x(W/2); that cat raises in PyTorch, so it is not
        #   reproduced here.
        raise NotImplementedError("stride=2 path of the reference is ill-formed")

    n, cin, h, w = x_nchw.shape
    p = h * w
    mid = params["w1f"].shape[0]
    cout = params["w3f"].shape[0]

    x = x_nchw.reshape(n, cin, p)                 # free, contiguous reshape
    masks = jnp.asarray(_dw_masks(h, w))          # trace-time constant (4,1,P)

    kernel = functools.partial(_shufflenet_unit_kernel, W=w)
    # TODO(synk): for large H*W (block would exceed VMEM), tile P with a 1-row
    # halo instead of one whole image per grid step.
    out = pl.pallas_call(
        kernel,
        out_shape=jax.ShapeDtypeStruct((n, cout, p), x_nchw.dtype),
        grid=(n,),
        in_specs=[
            pl.BlockSpec((1, cin, p), lambda i: (i, 0, 0)),
            pl.BlockSpec((mid, cin), lambda i: (0, 0)),
            pl.BlockSpec((mid, 1), lambda i: (0, 0)),
            pl.BlockSpec((9, mid, 1), lambda i: (0, 0, 0)),
            pl.BlockSpec((mid, 1), lambda i: (0, 0)),
            pl.BlockSpec((cout, mid), lambda i: (0, 0)),
            pl.BlockSpec((cout, 1), lambda i: (0, 0)),
            pl.BlockSpec((4, 1, p), lambda i: (0, 0, 0)),
        ],
        out_specs=pl.BlockSpec((1, cout, p), lambda i: (i, 0, 0)),
        compiler_params=pltpu.CompilerParams(
            dimension_semantics=("parallel",)),
    )(x, params["w1f"], params["b1f"], params["kdwf"], params["b2f"],
      params["w3f"], params["b3f"], masks)

    return out.reshape(n, cout, h, w)             # free, contiguous reshape


# ----------------------------------------------------------------------------
# Parameter init (deterministic) + BN folding into the kernel layouts
# ----------------------------------------------------------------------------
def init_params(key, in_channels, out_channels):
    mid = out_channels // 4
    ks = jax.random.split(key, 6)

    def bn_params(k, c):
        k1, k2, k3, k4 = jax.random.split(k, 4)
        return dict(
            gamma=jax.random.uniform(k1, (c,), jnp.float32, 0.5, 1.5),
            beta=0.1 * jax.random.normal(k2, (c,), jnp.float32),
            mean=0.1 * jax.random.normal(k3, (c,), jnp.float32),
            var=jax.random.uniform(k4, (c,), jnp.float32, 0.5, 1.5),
        )

    raw = dict(
        w1=0.3 * jax.random.normal(ks[0], (mid, in_channels, 1, 1), jnp.float32),
        bn1=bn_params(ks[1], mid),
        wdw=0.3 * jax.random.normal(ks[2], (mid, 1, 3, 3), jnp.float32),
        bn2=bn_params(ks[3], mid),
        w3=0.3 * jax.random.normal(ks[4], (out_channels, mid, 1, 1), jnp.float32),
        bn3=bn_params(ks[5], out_channels),
    )

    def fold(bn):
        s = bn["gamma"] / jnp.sqrt(bn["var"] + EPS)
        b = bn["beta"] - bn["mean"] * s
        return s, b

    s1, b1 = fold(raw["bn1"])
    s2, b2 = fold(raw["bn2"])
    s3, b3 = fold(raw["bn3"])

    kdw = raw["wdw"][:, 0].reshape(mid, 9) * s2[:, None]         # (mid, 9)
    folded = dict(
        w1f=raw["w1"][:, :, 0, 0] * s1[:, None],                 # (mid, Cin)
        b1f=b1[:, None],                                         # (mid, 1)
        kdwf=jnp.transpose(kdw, (1, 0))[:, :, None],             # (9, mid, 1)
        b2f=b2[:, None],                                         # (mid, 1)
        w3f=raw["w3"][:, :, 0, 0] * s3[:, None],                 # (Cout, mid)
        b3f=b3[:, None],                                         # (Cout, 1)
    )
    return raw, folded


# ----------------------------------------------------------------------------
# Pure-JAX reference (mirrors the PyTorch module in NCHW, eval-mode BN)
# ----------------------------------------------------------------------------
def ref_forward(x_nchw, raw):
    def bn(y, p):
        s = (p["gamma"] / jnp.sqrt(p["var"] + EPS))[None, :, None, None]
        return (y - p["mean"][None, :, None, None]) * s + p["beta"][None, :, None, None]

    y = jnp.einsum("nchw,oc->nohw", x_nchw, raw["w1"][:, :, 0, 0])
    y = jax.nn.relu(bn(y, raw["bn1"]))
    y = jax.lax.conv_general_dilated(
        y, raw["wdw"], window_strides=(1, 1), padding=((1, 1), (1, 1)),
        feature_group_count=raw["wdw"].shape[0],
        dimension_numbers=("NCHW", "OIHW", "NCHW"))
    y = bn(y, raw["bn2"])
    y = jnp.einsum("nchw,oc->nohw", y, raw["w3"][:, :, 0, 0])
    y = jax.nn.relu(bn(y, raw["bn3"]))
    return jax.nn.relu(y)


# ----------------------------------------------------------------------------
if __name__ == "__main__":
    key = jax.random.PRNGKey(0)
    k_x, k_p = jax.random.split(key)

    N, C_IN, C_OUT, H, W = 2, 16, 32, 16, 16
    x = jax.random.normal(k_x, (N, C_IN, H, W), jnp.float32)     # NCHW, like PyTorch

    raw_params, folded_params = init_params(k_p, C_IN, C_OUT)

    fwd = jax.jit(functools.partial(shufflenet_unit_forward, stride=1))
    out = jax.block_until_ready(fwd(x, folded_params))

    expected = ref_forward(x, raw_params)
    assert out.shape == (N, C_OUT, H, W), out.shape
    max_err = float(jnp.max(jnp.abs(out - expected)))
    assert jnp.allclose(out, expected, atol=1e-4, rtol=1e-4), max_err

    print("KERNEL_OK")
</pallas_src>

<mosaic_0001>
module attributes {stable_mosaic.version = 11 : i64} {
  func.func @_shufflenet_unit_kernel(%arg0: i32, %arg1: memref<1x16x256xf32, #tpu.memory_space<vmem>>, %arg2: memref<8x16xf32, #tpu.memory_space<vmem>>, %arg3: memref<8x1xf32, #tpu.memory_space<vmem>>, %arg4: memref<9x8x1xf32, #tpu.memory_space<vmem>>, %arg5: memref<8x1xf32, #tpu.memory_space<vmem>>, %arg6: memref<32x8xf32, #tpu.memory_space<vmem>>, %arg7: memref<32x1xf32, #tpu.memory_space<vmem>>, %arg8: memref<4x1x256xf32, #tpu.memory_space<vmem>>, %arg9: memref<1x32x256xf32, #tpu.memory_space<vmem>>) attributes {dimension_semantics = [#tpu.dimension_semantics<parallel>], iteration_bounds = array<i64: 2>, scalar_prefetch = 0 : i64, scratch_operands = 0 : i64, tpu.core_type = #tpu.core_type<tc>, window_params = [{transform_indices = @transform_0, window_bounds = array<i64: 1, 16, 256>}, {pipeline_mode = #tpu.pipeline_mode<synchronous>, transform_indices = @transform_1, window_bounds = array<i64: 8, 16>}, {pipeline_mode = #tpu.pipeline_mode<synchronous>, transform_indices = @transform_2, window_bounds = array<i64: 8, 1>}, {pipeline_mode = #tpu.pipeline_mode<synchronous>, transform_indices = @transform_3, window_bounds = array<i64: 9, 8, 1>}, {pipeline_mode = #tpu.pipeline_mode<synchronous>, transform_indices = @transform_4, window_bounds = array<i64: 8, 1>}, {pipeline_mode = #tpu.pipeline_mode<synchronous>, transform_indices = @transform_5, window_bounds = array<i64: 32, 8>}, {pipeline_mode = #tpu.pipeline_mode<synchronous>, transform_indices = @transform_6, window_bounds = array<i64: 32, 1>}, {pipeline_mode = #tpu.pipeline_mode<synchronous>, transform_indices = @transform_7, window_bounds = array<i64: 4, 1, 256>}, {transform_indices = @transform_8, window_bounds = array<i64: 1, 32, 256>}]} {
    %c0 = arith.constant 0 : index
    %c0_0 = arith.constant 0 : index
    %c0_1 = arith.constant 0 : index
    %0 = vector.load %arg1[%c0, %c0_0, %c0_1] : memref<1x16x256xf32, #tpu.memory_space<vmem>>, vector<1x16x256xf32>
    %1 = vector.shape_cast %0 : vector<1x16x256xf32> to vector<16x256xf32>
    %c0_2 = arith.constant 0 : index
    %c0_3 = arith.constant 0 : index
    %2 = vector.load %arg2[%c0_2, %c0_3] : memref<8x16xf32, #tpu.memory_space<vmem>>, vector<8x16xf32>
    %cst = arith.constant dense<0.000000e+00> : vector<8x256xf32>
    %3 = tpu.matmul %2, %1, %cst {dimension_numbers = #tpu.dot_dimension_numbers<[1], [0], [0], [1], [0, 0, 1, 1], [], []>} : vector<8x16xf32>, vector<16x256xf32>, vector<8x256xf32> -> vector<8x256xf32>
    %c0_4 = arith.constant 0 : index
    %c0_5 = arith.constant 0 : index
    %4 = vector.load %arg3[%c0_4, %c0_5] : memref<8x1xf32, #tpu.memory_space<vmem>>, vector<8x1xf32>
    %5 = vector.broadcast %4 : vector<8x1xf32> to vector<8x256xf32>
    %6 = arith.addf %3, %5 : vector<8x256xf32>
    %cst_6 = arith.constant 0.000000e+00 : f32
    %7 = vector.broadcast %cst_6 : f32 to vector<8x256xf32>
    %8 = arith.maximumf %6, %7 : vector<8x256xf32>
    %9 = tpu.iota {dimensions = array<i32: 1>} : vector<1x256xi32>
    %10 = arith.sitofp %9 : vector<1x256xi32> to vector<1x256xf32>
    %c1_i32 = arith.constant 1 : i32
    %11 = tpu.dynamic_rotate %10 by %c1_i32 dim 1 : vector<1x256xf32>, i32 -> vector<1x256xf32>
    %c0_i32 = arith.constant 0 : i32
    %12 = vector.broadcast %c0_i32 : i32 to vector<1x256xi32>
    %13 = arith.cmpi eq, %9, %12 : vector<1x256xi32>
    %c1_i32_7 = arith.constant 1 : i32
    %14 = vector.broadcast %c1_i32_7 : i32 to vector<1x256xi32>
    %15 = arith.subi %9, %14 : vector<1x256xi32>
    %c255_i32 = arith.constant 255 : i32
    %16 = vector.broadcast %c255_i32 : i32 to vector<1x256xi32>
    %17 = arith.select %13, %16, %15 : vector<1x256xi1>, vector<1x256xi32>
    %18 = arith.sitofp %17 : vector<1x256xi32> to vector<1x256xf32>
    %19 = arith.cmpf oeq, %11, %18 : vector<1x256xf32>
    %c1_i32_8 = arith.constant 1 : i32
    %20 = tpu.dynamic_rotate %8 by %c1_i32_8 dim 1 : vector<8x256xf32>, i32 -> vector<8x256xf32>
    %c255_i32_9 = arith.constant 255 : i32
    %21 = tpu.dynamic_rotate %8 by %c255_i32_9 dim 1 : vector<8x256xf32>, i32 -> vector<8x256xf32>
    %22 = vector.shape_cast %19 : vector<1x256xi1> to vector<1x256xi1>
    %23 = vector.broadcast %22 : vector<1x256xi1> to vector<8x256xi1>
    %24 = arith.select %23, %20, %21 : vector<8x256xi1>, vector<8x256xf32>
    %c0_10 = arith.constant 0 : index
    %c0_11 = arith.constant 0 : index
    %c0_12 = arith.constant 0 : index
    %25 = vector.load %arg8[%c0_10, %c0_11, %c0_12] : memref<4x1x256xf32, #tpu.memory_space<vmem>>, vector<1x1x256xf32>
    %26 = vector.shape_cast %25 : vector<1x1x256xf32> to vector<1x256xf32>
    %27 = vector.broadcast %26 : vector<1x256xf32> to vector<8x256xf32>
    %28 = arith.mulf %24, %27 : vector<8x256xf32>
    %c255_i32_13 = arith.constant 255 : i32
    %29 = tpu.dynamic_rotate %8 by %c255_i32_13 dim 1 : vector<8x256xf32>, i32 -> vector<8x256xf32>
    %c1_i32_14 = arith.constant 1 : i32
    %30 = tpu.dynamic_rotate %8 by %c1_i32_14 dim 1 : vector<8x256xf32>, i32 -> vector<8x256xf32>
    %31 = vector.shape_cast %19 : vector<1x256xi1> to vector<1x256xi1>
    %32 = vector.broadcast %31 : vector<1x256xi1> to vector<8x256xi1>
    %33 = arith.select %32, %29, %30 : vector<8x256xi1>, vector<8x256xf32>
    %c1 = arith.constant 1 : index
    %c0_15 = arith.constant 0 : index
    %c0_16 = arith.constant 0 : index
    %34 = vector.load %arg8[%c1, %c0_15, %c0_16] : memref<4x1x256xf32, #tpu.memory_space<vmem>>, vector<1x1x256xf32>
    %35 = vector.shape_cast %34 : vector<1x1x256xf32> to vector<1x256xf32>
    %36 = vector.broadcast %35 : vector<1x256xf32> to vector<8x256xf32>
    %37 = arith.mulf %33, %36 : vector<8x256xf32>
    %cst_17 = arith.constant 0.000000e+00 : f32
    %38 = vector.broadcast %cst_17 : f32 to vector<8x256xf32>
    %c0_18 = arith.constant 0 : index
    %c0_19 = arith.constant 0 : index
    %c0_20 = arith.constant 0 : index
    %39 = vector.load %arg4[%c0_18, %c0_19, %c0_20] : memref<9x8x1xf32, #tpu.memory_space<vmem>>, vector<1x8x1xf32>
    %40 = vector.shape_cast %39 : vector<1x8x1xf32> to vector<8x1xf32>
    %41 = vector.broadcast %40 : vector<8x1xf32> to vector<8x256xf32>
    %42 = arith.mulf %41, %28 : vector<8x256xf32>
    %c1_21 = arith.constant 1 : index
    %c0_22 = arith.constant 0 : index
    %c0_23 = arith.constant 0 : index
    %43 = vector.load %arg4[%c1_21, %c0_22, %c0_23] : memref<9x8x1xf32, #tpu.memory_space<vmem>>, vector<1x8x1xf32>
    %44 = vector.shape_cast %43 : vector<1x8x1xf32> to vector<8x1xf32>
    %45 = vector.broadcast %44 : vector<8x1xf32> to vector<8x256xf32>
    %46 = arith.mulf %45, %8 : vector<8x256xf32>
    %47 = arith.addf %42, %46 : vector<8x256xf32>
    %c2 = arith.constant 2 : index
    %c0_24 = arith.constant 0 : index
    %c0_25 = arith.constant 0 : index
    %48 = vector.load %arg4[%c2, %c0_24, %c0_25] : memref<9x8x1xf32, #tpu.memory_space<vmem>>, vector<1x8x1xf32>
    %49 = vector.shape_cast %48 : vector<1x8x1xf32> to vector<8x1xf32>
    %50 = vector.broadcast %49 : vector<8x1xf32> to vector<8x256xf32>
    %51 = arith.mulf %50, %37 : vector<8x256xf32>
    %52 = arith.addf %47, %51 : vector<8x256xf32>
    %c16_i32 = arith.constant 16 : i32
    %53 = tpu.dynamic_rotate %52 by %c16_i32 dim 1 : vector<8x256xf32>, i32 -> vector<8x256xf32>
    %c240_i32 = arith.constant 240 : i32
    %54 = tpu.dynamic_rotate %52 by %c240_i32 dim 1 : vector<8x256xf32>, i32 -> vector<8x256xf32>
    %55 = vector.shape_cast %19 : vector<1x256xi1> to vector<1x256xi1>
    %56 = vector.broadcast %55 : vector<1x256xi1> to vector<8x256xi1>
    %57 = arith.select %56, %53, %54 : vector<8x256xi1>, vector<8x256xf32>
    %c2_26 = arith.constant 2 : index
    %c0_27 = arith.constant 0 : index
    %c0_28 = arith.constant 0 : index
    %58 = vector.load %arg8[%c2_26, %c0_27, %c0_28] : memref<4x1x256xf32, #tpu.memory_space<vmem>>, vector<1x1x256xf32>
    %59 = vector.shape_cast %58 : vector<1x1x256xf32> to vector<1x256xf32>
    %60 = vector.broadcast %59 : vector<1x256xf32> to vector<8x256xf32>
    %61 = arith.mulf %57, %60 : vector<8x256xf32>
    %62 = arith.addf %38, %61 : vector<8x256xf32>
    %c3 = arith.constant 3 : index
    %c0_29 = arith.constant 0 : index
    %c0_30 = arith.constant 0 : index
    %63 = vector.load %arg4[%c3, %c0_29, %c0_30] : memref<9x8x1xf32, #tpu.memory_space<vmem>>, vector<1x8x1xf32>
    %64 = vector.shape_cast %63 : vector<1x8x1xf32> to vector<8x1xf32>
    %65 = vector.broadcast %64 : vector<8x1xf32> to vector<8x256xf32>
    %66 = arith.mulf %65, %28 : vector<8x256xf32>
    %c4 = arith.constant 4 : index
    %c0_31 = arith.constant 0 : index
    %c0_32 = arith.constant 0 : index
    %67 = vector.load %arg4[%c4, %c0_31, %c0_32] : memref<9x8x1xf32, #tpu.memory_space<vmem>>, vector<1x8x1xf32>
    %68 = vector.shape_cast %67 : vector<1x8x1xf32> to vector<8x1xf32>
    %69 = vector.broadcast %68 : vector<8x1xf32> to vector<8x256xf32>
    %70 = arith.mulf %69, %8 : vector<8x256xf32>
    %71 = arith.addf %66, %70 : vector<8x256xf32>
    %c5 = arith.constant 5 : index
    %c0_33 = arith.constant 0 : index
    %c0_34 = arith.constant 0 : index
    %72 = vector.load %arg4[%c5, %c0_33, %c0_34] : memref<9x8x1xf32, #tpu.memory_space<vmem>>, vector<1x8x1xf32>
    %73 = vector.shape_cast %72 : vector<1x8x1xf32> to vector<8x1xf32>
    %74 = vector.broadcast %73 : vector<8x1xf32> to vector<8x256xf32>
    %75 = arith.mulf %74, %37 : vector<8x256xf32>
    %76 = arith.addf %71, %75 : vector<8x256xf32>
    %77 = arith.addf %62, %76 : vector<8x256xf32>
    %c6 = arith.constant 6 : index
    %c0_35 = arith.constant 0 : index
    %c0_36 = arith.constant 0 : index
    %78 = vector.load %arg4[%c6, %c0_35, %c0_36] : memref<9x8x1xf32, #tpu.memory_space<vmem>>, vector<1x8x1xf32>
    %79 = vector.shape_cast %78 : vector<1x8x1xf32> to vector<8x1xf32>
    %80 = vector.broadcast %79 : vector<8x1xf32> to vector<8x256xf32>
    %81 = arith.mulf %80, %28 : vector<8x256xf32>
    %c7 = arith.constant 7 : index
    %c0_37 = arith.constant 0 : index
    %c0_38 = arith.constant 0 : index
    %82 = vector.load %arg4[%c7, %c0_37, %c0_38] : memref<9x8x1xf32, #tpu.memory_space<vmem>>, vector<1x8x1xf32>
    %83 = vector.shape_cast %82 : vector<1x8x1xf32> to vector<8x1xf32>
    %84 = vector.broadcast %83 : vector<8x1xf32> to vector<8x256xf32>
    %85 = arith.mulf %84, %8 : vector<8x256xf32>
    %86 = arith.addf %81, %85 : vector<8x256xf32>
    %c8 = arith.constant 8 : index
    %c0_39 = arith.constant 0 : index
    %c0_40 = arith.constant 0 : index
    %87 = vector.load %arg4[%c8, %c0_39, %c0_40] : memref<9x8x1xf32, #tpu.memory_space<vmem>>, vector<1x8x1xf32>
    %88 = vector.shape_cast %87 : vector<1x8x1xf32> to vector<8x1xf32>
    %89 = vector.broadcast %88 : vector<8x1xf32> to vector<8x256xf32>
    %90 = arith.mulf %89, %37 : vector<8x256xf32>
    %91 = arith.addf %86, %90 : vector<8x256xf32>
    %c240_i32_41 = arith.constant 240 : i32
    %92 = tpu.dynamic_rotate %91 by %c240_i32_41 dim 1 : vector<8x256xf32>, i32 -> vector<8x256xf32>
    %c16_i32_42 = arith.constant 16 : i32
    %93 = tpu.dynamic_rotate %91 by %c16_i32_42 dim 1 : vector<8x256xf32>, i32 -> vector<8x256xf32>
    %94 = vector.shape_cast %19 : vector<1x256xi1> to vector<1x256xi1>
    %95 = vector.broadcast %94 : vector<1x256xi1> to vector<8x256xi1>
    %96 = arith.select %95, %92, %93 : vector<8x256xi1>, vector<8x256xf32>
    %c3_43 = arith.constant 3 : index
    %c0_44 = arith.constant 0 : index
    %c0_45 = arith.constant 0 : index
    %97 = vector.load %arg8[%c3_43, %c0_44, %c0_45] : memref<4x1x256xf32, #tpu.memory_space<vmem>>, vector<1x1x256xf32>
    %98 = vector.shape_cast %97 : vector<1x1x256xf32> to vector<1x256xf32>
    %99 = vector.broadcast %98 : vector<1x256xf32> to vector<8x256xf32>
    %100 = arith.mulf %96, %99 : vector<8x256xf32>
    %101 = arith.addf %77, %100 : vector<8x256xf32>
    %c0_46 = arith.constant 0 : index
    %c0_47 = arith.constant 0 : index
    %102 = vector.load %arg5[%c0_46, %c0_47] : memref<8x1xf32, #tpu.memory_space<vmem>>, vector<8x1xf32>
    %103 = vector.broadcast %102 : vector<8x1xf32> to vector<8x256xf32>
    %104 = arith.addf %101, %103 : vector<8x256xf32>
    %c0_48 = arith.constant 0 : index
    %c0_49 = arith.constant 0 : index
    %105 = vector.load %arg6[%c0_48, %c0_49] : memref<32x8xf32, #tpu.memory_space<vmem>>, vector<32x8xf32>
    %cst_50 = arith.constant dense<0.000000e+00> : vector<32x256xf32>
    %106 = tpu.matmul %105, %104, %cst_50 {dimension_numbers = #tpu.dot_dimension_numbers<[1], [0], [0], [1], [0, 0, 1, 1], [], []>} : vector<32x8xf32>, vector<8x256xf32>, vector<32x256xf32> -> vector<32x256xf32>
    %c0_51 = arith.constant 0 : index
    %c0_52 = arith.constant 0 : index
    %107 = vector.load %arg7[%c0_51, %c0_52] : memref<32x1xf32, #tpu.memory_space<vmem>>, vector<32x1xf32>
    %108 = vector.broadcast %107 : vector<32x1xf32> to vector<32x256xf32>
    %109 = arith.addf %106, %108 : vector<32x256xf32>
    %cst_53 = arith.constant 0.000000e+00 : f32
    %110 = vector.broadcast %cst_53 : f32 to vector<32x256xf32>
    %111 = arith.maximumf %109, %110 : vector<32x256xf32>
    %c0_54 = arith.constant 0 : index
    %c0_55 = arith.constant 0 : index
    %c0_56 = arith.constant 0 : index
    %112 = vector.load %arg9[%c0_54, %c0_55, %c0_56] : memref<1x32x256xf32, #tpu.memory_space<vmem>>, vector<1x32x256xf32>
    %113 = vector.shape_cast %112 : vector<1x32x256xf32> to vector<32x256xf32>
    %114 = vector.shape_cast %111 : vector<32x256xf32> to vector<1x32x256xf32>
    tpu.vector_store %arg9[%c0_54, %c0_55, %c0_56], %114 {strides = array<i32>} : memref<1x32x256xf32, #tpu.memory_space<vmem>>, vector<1x32x256xf32>,
    return
  }
  func.func @transform_0(%arg0: i32) -> (i32, i32, i32) {
    %c0_i32 = arith.constant 0 : i32
    %c0_i32_0 = arith.constant 0 : i32
    %c0_i32_1 = arith.constant 0 : i32
    return %arg0, %c0_i32, %c0_i32_0 : i32, i32, i32
  }
  func.func @transform_1(%arg0: i32) -> (i32, i32) {
    %c0_i32 = arith.constant 0 : i32
    %c0_i32_0 = arith.constant 0 : i32
    %c0_i32_1 = arith.constant 0 : i32
    return %c0_i32, %c0_i32_0 : i32, i32
  }
  func.func @transform_2(%arg0: i32) -> (i32, i32) {
    %c0_i32 = arith.constant 0 : i32
    %c0_i32_0 = arith.constant 0 : i32
    %c0_i32_1 = arith.constant 0 : i32
    return %c0_i32, %c0_i32_0 : i32, i32
  }
  func.func @transform_3(%arg0: i32) -> (i32, i32, i32) {
    %c0_i32 = arith.constant 0 : i32
    %c0_i32_0 = arith.constant 0 : i32
    %c0_i32_1 = arith.constant 0 : i32
    %c0_i32_2 = arith.constant 0 : i32
    return %c0_i32, %c0_i32_0, %c0_i32_1 : i32, i32, i32
  }
  func.func @transform_4(%arg0: i32) -> (i32, i32) {
    %c0_i32 = arith.constant 0 : i32
    %c0_i32_0 = arith.constant 0 : i32
    %c0_i32_1 = arith.constant 0 : i32
    return %c0_i32, %c0_i32_0 : i32, i32
  }
  func.func @transform_5(%arg0: i32) -> (i32, i32) {
    %c0_i32 = arith.constant 0 : i32
    %c0_i32_0 = arith.constant 0 : i32
    %c0_i32_1 = arith.constant 0 : i32
    return %c0_i32, %c0_i32_0 : i32, i32
  }
  func.func @transform_6(%arg0: i32) -> (i32, i32) {
    %c0_i32 = arith.constant 0 : i32
    %c0_i32_0 = arith.constant 0 : i32
    %c0_i32_1 = arith.constant 0 : i32
    return %c0_i32, %c0_i32_0 : i32, i32
  }
  func.func @transform_7(%arg0: i32) -> (i32, i32, i32) {
    %c0_i32 = arith.constant 0 : i32
    %c0_i32_0 = arith.constant 0 : i32
    %c0_i32_1 = arith.constant 0 : i32
    %c0_i32_2 = arith.constant 0 : i32
    return %c0_i32, %c0_i32_0, %c0_i32_1 : i32, i32, i32
  }
  func.func @transform_8(%arg0: i32) -> (i32, i32, i32) {
    %c0_i32 = arith.constant 0 : i32
    %c0_i32_0 = arith.constant 0 : i32
    %c0_i32_1 = arith.constant 0 : i32
    return %arg0, %c0_i32, %c0_i32_0 : i32, i32, i32
  }
}

</mosaic_0001>

<llo_original>
// kernel: shufflenet_unit_forward.1
$region0: #{shufflenet_unit_forward.1}
  #allocation0 [shape = 'u32[]', space=smem, size = 0x4, offset = 0x4, fixed_abs, tag = 'smem constant byte address 0x4 - core index']
  #allocation1 [shape = 'u32[144,128]{1,0:T(1,128)}', space=vmem, size = 0x12000, scoped, tag = 'internal scratch']
  %s0 = inlined_call_operand.vmem [shape: f32[2,16,256], index: 0, kind: input, shape index: {}]
  %s1 = inlined_call_operand.vmem [shape: f32[8,16], index: 1, kind: input, shape index: {}]
  %s2 = inlined_call_operand.vmem [shape: f32[8,1], index: 2, kind: input, shape index: {}]
  %s3 = inlined_call_operand.vmem [shape: f32[9,8,1], index: 3, kind: input, shape index: {}]
  %s4 = inlined_call_operand.vmem [shape: f32[8,1], index: 4, kind: input, shape index: {}]
  %s5 = inlined_call_operand.vmem [shape: f32[32,8], index: 5, kind: input, shape index: {}]
  %s6 = inlined_call_operand.vmem [shape: f32[32,1], index: 6, kind: input, shape index: {}]
  %s7 = inlined_call_operand.vmem [shape: f32[4,1,256], index: 7, kind: input, shape index: {}]
  %s8 = inlined_call_operand.vmem [shape: f32[2,32,256], index: 8, kind: output, shape index: {}]
  %s9 = sld [smem:[#allocation0]]
  $region65: #{shufflenet_unit_forward.1} parent=0
    _
  %s11 = ssub.s32 1, %s9
  %s12 = scalar_select 0, %s11, %s9
  loop: start=0, step=1, limit=4
  $region2: #{shufflenet_unit_forward.1} parent=0 // loop_pre_header
    _
  $region3: #{shufflenet_unit_forward.1} parent=0 // loop_header
    %s14 = sphi 0, %s18
    %p15 = scmp.ge.s32.totalorder %s14, 4
    %s24 = sphi 0, %s26
    %s27 = sphi 0, %s24
    %s28 = sphi 0, %s27
    %s44 = sphi 0, %s28
    %s48 = sphi 0, %s48
    %s50 = sphi 0, %s48
    %s51 = sphi 0, %s50
    %s65 = sphi 0, %s51
    %s69 = sphi 0, %s69
    %s71 = sphi 0, %s69
    %s72 = sphi 0, %s71
    %s86 = sphi 0, %s72
    %s90 = sphi 0, %s90
    %s92 = sphi 0, %s90
    %s93 = sphi 0, %s92
    %s107 = sphi 0, %s93
    %s111 = sphi 0, %s111
    %s113 = sphi 0, %s111
    %s114 = sphi 0, %s113
    %s128 = sphi 0, %s114
    %s132 = sphi 0, %s132
    %s134 = sphi 0, %s132
    %s135 = sphi 0, %s134
    %s149 = sphi 0, %s135
    %s153 = sphi 0, %s153
    %s155 = sphi 0, %s153
    %s156 = sphi 0, %s155
    %s170 = sphi 0, %s156
    %s174 = sphi 0, %s174
    %s176 = sphi 0, %s174
    %s177 = sphi 0, %s176
    %s191 = sphi 0, %s177
    %s197 = sphi 0, %s199
    %s200 = sphi 0, %s197
    %s201 = sphi 0, %s200
    %s217 = sphi 0, %s201
  $region4: #{shufflenet_unit_forward.1} parent=0 // loop_header_branch
    %17 = sbr.rel (%p15) target = $region8
  $region5: #{shufflenet_unit_forward.1} parent=0 // loop_body
    %s19 = ssub.s32 %s14, 1
    %s20 = ssub.s32 %s14, 2
    %s21 = sadd.s32 %s14, 1
    %s22 = ssub.s32 %s14, %s21
    %p23 = scmp.eq.s32.totalorder %s22, 0
    %s25 = sadd.s32 %s24, 1
    %s26 = scalar_select %p23, %s24, %s25
    %p29 = pneg %p23
    %p30 = scmp.eq.s32.totalorder %s14, 1
    %p31 = por %p29, %p30
    %p32 = scmp.ne.s32.totalorder %s24, %s27
    %p33 = scmp.eq.s32.totalorder %s14, 0
    %p34 = por %p32, %p33
    %p35 = scmp.ne.s32.totalorder %s24, %s27
    %p36 = scmp.eq.s32.totalorder %s19, 1
    %p37 = por %p35, %p36
    %p38 = scmp.ne.s32.totalorder %s27, %s28
    %p39 = scmp.eq.s32.totalorder %s19, 0
    %p40 = por %p38, %p39
    %p41 = scmp.ne.s32.totalorder %s27, %s28
    %p42 = scmp.eq.s32.totalorder %s20, 1
    %p43 = por %p41, %p42
    %p45 = scmp.ne.s32.totalorder %s28, %s44
    %p46 = scmp.eq.s32.totalorder %s20, 0
    %p47 = por %p45, %p46
    %s49 = sadd.s32 %s48, 1
    %p52 = scmp.eq.s32.totalorder %s14, 1
    %p53 = scmp.ne.s32.totalorder %s48, %s50
    %p54 = scmp.eq.s32.totalorder %s14, 0
    %p55 = por %p53, %p54
    %p56 = scmp.ne.s32.totalorder %s48, %s50
    %p57 = scmp.eq.s32.totalorder %s19, 1
    %p58 = por %p56, %p57
    %p59 = scmp.ne.s32.totalorder %s50, %s51
    %p60 = scmp.eq.s32.totalorder %s19, 0
    %p61 = por %p59, %p60
    %p62 = scmp.ne.s32.totalorder %s50, %s51
    %p63 = scmp.eq.s32.totalorder %s20, 1
    %p64 = por %p62, %p63
    %p66 = scmp.ne.s32.totalorder %s51, %s65
    %p67 = scmp.eq.s32.totalorder %s20, 0
    %p68 = por %p66, %p67
    %s70 = sadd.s32 %s69, 1
    %p73 = scmp.eq.s32.totalorder %s14, 1
    %p74 = scmp.ne.s32.totalorder %s69, %s71
    %p75 = scmp.eq.s32.totalorder %s14, 0
    %p76 = por %p74, %p75
    %p77 = scmp.ne.s32.totalorder %s69, %s71
    %p78 = scmp.eq.s32.totalorder %s19, 1
    %p79 = por %p77, %p78
    %p80 = scmp.ne.s32.totalorder %s71, %s72
    %p81 = scmp.eq.s32.totalorder %s19, 0
    %p82 = por %p80, %p81
    %p83 = scmp.ne.s32.totalorder %s71, %s72
    %p84 = scmp.eq.s32.totalorder %s20, 1
    %p85 = por %p83, %p84
    %p87 = scmp.ne.s32.totalorder %s72, %s86
    %p88 = scmp.eq.s32.totalorder %s20, 0
    %p89 = por %p87, %p88
    %s91 = sadd.s32 %s90, 1
    %p94 = scmp.eq.s32.totalorder %s14, 1
    %p95 = scmp.ne.s32.totalorder %s90, %s92
    %p96 = scmp.eq.s32.totalorder %s14, 0
    %p97 = por %p95, %p96
    %p98 = scmp.ne.s32.totalorder %s90, %s92
    %p99 = scmp.eq.s32.totalorder %s19, 1
    %p100 = por %p98, %p99
    %p101 = scmp.ne.s32.totalorder %s92, %s93
    %p102 = scmp.eq.s32.totalorder %s19, 0
    %p103 = por %p101, %p102
    %p104 = scmp.ne.s32.totalorder %s92, %s93
    %p105 = scmp.eq.s32.totalorder %s20, 1
    %p106 = por %p104, %p105
    %p108 = scmp.ne.s32.totalorder %s93, %s107
    %p109 = scmp.eq.s32.totalorder %s20, 0
    %p110 = por %p108, %p109
    %s112 = sadd.s32 %s111, 1
    %p115 = scmp.eq.s32.totalorder %s14, 1
    %p116 = scmp.ne.s32.totalorder %s111, %s113
    %p117 = scmp.eq.s32.totalorder %s14, 0
    %p118 = por %p116, %p117
    %p119 = scmp.ne.s32.totalorder %s111, %s113
    %p120 = scmp.eq.s32.totalorder %s19, 1
    %p121 = por %p119, %p120
    %p122 = scmp.ne.s32.totalorder %s113, %s114
    %p123 = scmp.eq.s32.totalorder %s19, 0
    %p124 = por %p122, %p123
    %p125 = scmp.ne.s32.totalorder %s113, %s114
    %p126 = scmp.eq.s32.totalorder %s20, 1
    %p127 = por %p125, %p126
    %p129 = scmp.ne.s32.totalorder %s114, %s128
    %p130 = scmp.eq.s32.totalorder %s20, 0
    %p131 = por %p129, %p130
    %s133 = sadd.s32 %s132, 1
    %p136 = scmp.eq.s32.totalorder %s14, 1
    %p137 = scmp.ne.s32.totalorder %s132, %s134
    %p138 = scmp.eq.s32.totalorder %s14, 0
    %p139 = por %p137, %p138
    %p140 = scmp.ne.s32.totalorder %s132, %s134
    %p141 = scmp.eq.s32.totalorder %s19, 1
    %p142 = por %p140, %p141
    %p143 = scmp.ne.s32.totalorder %s134, %s135
    %p144 = scmp.eq.s32.totalorder %s19, 0
    %p145 = por %p143, %p144
    %p146 = scmp.ne.s32.totalorder %s134, %s135
    %p147 = scmp.eq.s32.totalorder %s20, 1
    %p148 = por %p146, %p147
    %p150 = scmp.ne.s32.totalorder %s135, %s149
    %p151 = scmp.eq.s32.totalorder %s20, 0
    %p152 = por %p150, %p151
    %s154 = sadd.s32 %s153, 1
    %p157 = scmp.eq.s32.totalorder %s14, 1
    %p158 = scmp.ne.s32.totalorder %s153, %s155
    %p159 = scmp.eq.s32.totalorder %s14, 0
    %p160 = por %p158, %p159
    %p161 = scmp.ne.s32.totalorder %s153, %s155
    %p162 = scmp.eq.s32.totalorder %s19, 1
    %p163 = por %p161, %p162
    %p164 = scmp.ne.s32.totalorder %s155, %s156
    %p165 = scmp.eq.s32.totalorder %s19, 0
    %p166 = por %p164, %p165
    %p167 = scmp.ne.s32.totalorder %s155, %s156
    %p168 = scmp.eq.s32.totalorder %s20, 1
    %p169 = por %p167, %p168
    %p171 = scmp.ne.s32.totalorder %s156, %s170
    %p172 = scmp.eq.s32.totalorder %s20, 0
    %p173 = por %p171, %p172
    %s175 = sadd.s32 %s174, 1
    %p178 = scmp.eq.s32.totalorder %s14, 1
    %p179 = scmp.ne.s32.totalorder %s174, %s176
    %p180 = scmp.eq.s32.totalorder %s14, 0
    %p181 = por %p179, %p180
    %p182 = scmp.ne.s32.totalorder %s174, %s176
    %p183 = scmp.eq.s32.totalorder %s19, 1
    %p184 = por %p182, %p183
    %p185 = scmp.ne.s32.totalorder %s176, %s177
    %p186 = scmp.eq.s32.totalorder %s19, 0
    %p187 = por %p185, %p186
    %p188 = scmp.ne.s32.totalorder %s176, %s177
    %p189 = scmp.eq.s32.totalorder %s20, 1
    %p190 = por %p188, %p189
    %p192 = scmp.ne.s32.totalorder %s177, %s191
    %p193 = scmp.eq.s32.totalorder %s20, 0
    %p194 = por %p192, %p193
    %s195 = ssub.s32 %s14, %s21
    %p196 = scmp.eq.s32.totalorder %s195, 0
    %s198 = sadd.s32 %s197, 1
    %s199 = scalar_select %p196, %s197, %s198
    %p202 = pneg %p196
    %p203 = scmp.eq.s32.totalorder %s14, 1
    %p204 = por %p202, %p203
    %p205 = scmp.ne.s32.totalorder %s197, %s200
    %p206 = scmp.eq.s32.totalorder %s14, 0
    %p207 = por %p205, %p206
    %p208 = scmp.ne.s32.totalorder %s197, %s200
    %p209 = scmp.eq.s32.totalorder %s19, 1
    %p210 = por %p208, %p209
    %p211 = scmp.ne.s32.totalorder %s200, %s201
    %p212 = scmp.eq.s32.totalorder %s19, 0
    %p213 = por %p211, %p212
    %p214 = scmp.ne.s32.totalorder %s200, %s201
    %p215 = scmp.eq.s32.totalorder %s20, 1
    %p216 = por %p214, %p215
    %p218 = scmp.ne.s32.totalorder %s201, %s217
    %p219 = scmp.eq.s32.totalorder %s20, 0
    %p220 = por %p218, %p219
    %p221 = scmp.le.s32.totalorder 1, %s14
    %p222 = scmp.lt.s32.totalorder %s14, 3
    %p223 = pnand %p221, %p222
    %p224 = pneg %p223
    // Predicated region
    $region9: #{shufflenet_unit_forward.1} parent=5 // pred_check
      _
    $region10: #{shufflenet_unit_forward.1} parent=5 // pred_check_branch
      %226 = sbr.rel (%p223) target = $region12
    $region11: #{shufflenet_unit_forward.1} parent=5 // pred_region
      %s227 = ssub.s32 %s14, 1
      // Predicated region
      $region13: #{shufflenet_unit_forward.1} parent=11 // pred_check
        %p228 = pneg %p61
      $region14: #{shufflenet_unit_forward.1} parent=11 // pred_check_branch
        %230 = sbr.rel (%p228) target = $region16
      $region15: #{shufflenet_unit_forward.1} parent=11 // pred_region
        _
      $region16: #{shufflenet_unit_forward.1} parent=11 // pred_fallthru
        _
      // Predicated region
      $region17: #{shufflenet_unit_forward.1} parent=11 // pred_check
        %p231 = pneg %p82
      $region18: #{shufflenet_unit_forward.1} parent=11 // pred_check_branch
        %233 = sbr.rel (%p231) target = $region20
      $region19: #{shufflenet_unit_forward.1} parent=11 // pred_region
        _
      $region20: #{shufflenet_unit_forward.1} parent=11 // pred_fallthru
        _
      // Predicated region
      $region21: #{shufflenet_unit_forward.1} parent=11 // pred_check
        %p234 = pneg %p103
      $region22: #{shufflenet_unit_forward.1} parent=11 // pred_check_branch
        %236 = sbr.rel (%p234) target = $region24
      $region23: #{shufflenet_unit_forward.1} parent=11 // pred_region
        _
      $region24: #{shufflenet_unit_forward.1} parent=11 // pred_fallthru
        _
      // Predicated region
      $region25: #{shufflenet_unit_forward.1} parent=11 // pred_check
        %p237 = pneg %p124
      $region26: #{shufflenet_unit_forward.1} parent=11 // pred_check_branch
        %239 = sbr.rel (%p237) target = $region28
      $region27: #{shufflenet_unit_forward.1} parent=11 // pred_region
        _
      $region28: #{shufflenet_unit_forward.1} parent=11 // pred_fallthru
        _
      // Predicated region
      $region29: #{shufflenet_unit_forward.1} parent=11 // pred_check
        %p240 = pneg %p145
      $region30: #{shufflenet_unit_forward.1} parent=11 // pred_check_branch
        %242 = sbr.rel (%p240) target = $region32
      $region31: #{shufflenet_unit_forward.1} parent=11 // pred_region
        _
      $region32: #{shufflenet_unit_forward.1} parent=11 // pred_fallthru
        _
      // Predicated region
      $region33: #{shufflenet_unit_forward.1} parent=11 // pred_check
        %p243 = pneg %p166
      $region34: #{shufflenet_unit_forward.1} parent=11 // pred_check_branch
        %245 = sbr.rel (%p243) target = $region36
      $region35: #{shufflenet_unit_forward.1} parent=11 // pred_region
        _
      $region36: #{shufflenet_unit_forward.1} parent=11 // pred_fallthru
        _
      // Predicated region
      $region37: #{shufflenet_unit_forward.1} parent=11 // pred_check
        %p246 = pneg %p187
      $region38: #{shufflenet_unit_forward.1} parent=11 // pred_check_branch
        %248 = sbr.rel (%p246) target = $region40
      $region39: #{shufflenet_unit_forward.1} parent=11 // pred_region
        _
      $region40: #{shufflenet_unit_forward.1} parent=11 // pred_fallthru
        _
    $region12: #{shufflenet_unit_forward.1} parent=5 // pred_fallthru
      _
    %p249 = scmp.lt.s32.totalorder %s14, 2
    // Predicated region
    $region41: #{shufflenet_unit_forward.1} parent=5 // pred_check
      %p250 = pneg %p249
    $region42: #{shufflenet_unit_forward.1} parent=5 // pred_check_branch
      %252 = sbr.rel (%p250) target = $region44
    $region43: #{shufflenet_unit_forward.1} parent=5 // pred_region
      // Predicated region
      $region45: #{shufflenet_unit_forward.1} parent=43 // pred_check
        %p253 = pneg %p34
      $region46: #{shufflenet_unit_forward.1} parent=43 // pred_check_branch
        %255 = sbr.rel (%p253) target = $region48
      $region47: #{shufflenet_unit_forward.1} parent=43 // pred_region
        %p256 = scmp.lt.s32.totalorder %s14, 1
        %s257 = scalar_select %p256, %s14, 1
        %s258 = smul.addr %s257, 4
        %s259 = smul.addr %s258, 8
        %s260 = scalar_lea.vmem %s0, %s259
      $region48: #{shufflenet_unit_forward.1} parent=43 // pred_fallthru
        _
    $region44: #{shufflenet_unit_forward.1} parent=5 // pred_fallthru
      _
    %p261 = scmp.le.s32.totalorder 1, %s14
    %p262 = scmp.lt.s32.totalorder %s14, 3
    %p263 = pnand %p261, %p262
    %p264 = pneg %p263
    // Predicated region
    $region49: #{shufflenet_unit_forward.1} parent=5 // pred_check
      _
    $region50: #{shufflenet_unit_forward.1} parent=5 // pred_check_branch
      %266 = sbr.rel (%p263) target = $region52
    $region51: #{shufflenet_unit_forward.1} parent=5 // pred_region
      %s267 = ssub.s32 %s14, 1
      %p268 = scmp.lt.s32.totalorder %s19, 1
      %s269 = scalar_select %p268, %s19, 1
      %s270 = smul.addr %s269, 4
      %s271 = smul.addr %s270, 8
      %s272 = scalar_lea.vmem %s0, %s271
      %p273 = pneg %p40
      %p274 = pneg %p37
      %p275 = pneg %p61
      %p276 = pneg %p58
      %p277 = pneg %p82
      %p278 = pneg %p79
      %p279 = pneg %p103
      %p280 = pneg %p100
      %p281 = pneg %p124
      %p282 = pneg %p121
      %p283 = pneg %p145
      %p284 = pneg %p142
      %p285 = pneg %p166
      %p286 = pneg %p163
      %p287 = pneg %p187
      %p288 = pneg %p184
      %p289 = pneg %p213
      %p290 = pneg %p210
      %p291 = scmp.lt.s32.totalorder %s19, 1
      %s292 = scalar_select %p291, %s19, 1
      %s293 = smul.addr %s292, 8
      %s294 = smul.addr %s293, 8
      %s295 = scalar_lea.vmem %s8, %s294
      %p296 = scmp.lt.s32.totalorder %s19, 1
      %s297 = scalar_select %p296, %s19, 1
      %s298 = smul.addr %s297, 4
      %s299 = smul.addr %s298, 8
      %s300 = scalar_lea.vmem %s0, %s299
      %p301 = scmp.lt.s32.totalorder %s19, 1
      %s302 = scalar_select %p301, %s19, 1
      %s303 = smul.addr %s302, 8
      %s304 = smul.addr %s303, 8
      %s305 = scalar_lea.vmem %s8, %s304
      %v306 = vld [vmem:[%s300] sm:$0xff]
      %v307 = vld [vmem:[%s300 + $0x8] sm:$0xff]
      %v308 = vld [vmem:[%s300 + $0x10] sm:$0xff]
      %v309 = vld [vmem:[%s300 + $0x18] sm:$0xff]
      %v310 = vld [vmem:[%s1] sm:$0xff]
      %v311 = vld [vmem:[%s2] sm:$0xff]
      %313 = vset.pattern.permute.xlu0 0
      %314 = vperm.xlu0 %313, %v311
      %v315 = vpop.permute.xlu0 %314
      %vm317 = vcmask 130048
      %v319 = vsel %vm317, %v310, 0
      %321 = vmatprep.subr.mxu0 %v307
      %322 = vmatpush1.msra.mxu0 %v306
      %323 = vmatprep.subr.mxu0 %v309
      %324 = vmatpush1.msra.mxu0 %v308
      %325 = vmatprep.subr.mxu0 0.0
      %326 = vmatpush1.msra.mxu0 0.0
      %327 = vmatprep.subr.mxu0 0.0
      %328 = vmatpush1.msra.mxu0 0.0
      %329 = vmatprep.subr.mxu0 0.0
      %330 = vmatpush1.msra.mxu0 0.0
      %331 = vmatprep.subr.mxu0 0.0
      %332 = vmatpush1.msra.mxu0 0.0
      %333 = vmatprep.subr.mxu0 0.0
      %334 = vmatpush1.msra.mxu0 0.0
      %335 = vmatprep.subr.mxu0 0.0
      %336 = vmatpush1.msra.mxu0 0.0
      %337 = vmatprep.subr.mxu0 0.0
      %338 = vmatpush1.msra.mxu0 0.0
      %339 = vmatprep.subr.mxu0 0.0
      %340 = vmatpush1.msra.mxu0 0.0
      %341 = vmatprep.subr.mxu0 0.0
      %342 = vmatpush1.msra.mxu0 0.0
      %343 = vmatprep.subr.mxu0 0.0
      %344 = vmatpush1.msra.mxu0 0.0
      %345 = vmatprep.subr.mxu0 0.0
      %346 = vmatpush1.msra.mxu0 0.0
      %347 = vmatprep.subr.mxu0 0.0
      %348 = vmatpush1.msra.mxu0 0.0
      %349 = vmatprep.subr.mxu0 0.0
      %350 = vmatpush1.msra.mxu0 0.0
      %351 = vmatprep.subr.mxu0 0.0
      %352 = vmatpush1.msra.mxu0 0.0
      %353 = vmatprep.subr.mxu0 0.0
      %354 = vmatpush1.msra.mxu0 0.0
      %355 = vmatprep.subr.mxu0 0.0
      %356 = vmatpush1.msra.mxu0 0.0
      %357 = vmatprep.subr.mxu0 0.0
      %358 = vmatpush1.msra.mxu0 0.0
      %359 = vmatprep.subr.mxu0 0.0
      %360 = vmatpush1.msra.mxu0 0.0
      %361 = vmatprep.subr.mxu0 0.0
      %362 = vmatpush1.msra.mxu0 0.0
      %363 = vmatprep.subr.mxu0 0.0
      %364 = vmatpush1.msra.mxu0 0.0
      %365 = vmatprep.subr.mxu0 0.0
      %366 = vmatpush1.msra.mxu0 0.0
      %367 = vmatprep.subr.mxu0 0.0
      %368 = vmatpush1.msra.mxu0 0.0
      %369 = vmatprep.subr.mxu0 0.0
      %370 = vmatpush1.msra.mxu0 0.0
      %371 = vmatprep.subr.mxu0 0.0
      %372 = vmatpush1.msra.mxu0 0.0
      %373 = vmatprep.subr.mxu0 0.0
      %374 = vmatpush1.msra.mxu0 0.0
      %375 = vmatprep.subr.mxu0 0.0
      %376 = vmatpush1.msra.mxu0 0.0
      %377 = vmatprep.subr.mxu0 0.0
      %378 = vmatpush1.msra.mxu0 0.0
      %379 = vmatprep.subr.mxu0 0.0
      %380 = vmatpush1.msra.mxu0 0.0
      %381 = vmatprep.subr.mxu0 0.0
      %382 = vmatpush1.msra.mxu0 0.0
      %383 = vmatprep.subr.mxu0 0.0
      %384 = vmatpush1.msra.mxu0 0.0
      %385 = vmatprep.mubr.f32.mxu0 0.0
      %386 = vmatmul.mubr.f32.gmra.mrb[0].mxu0 %v319
      %v387 = vpop.f32.mrb[0].mxu0
      %v388 = vadd.f32 %v315, %v387
      %v389 = vpop.f32.mrb[0].mxu0
      %v390 = vadd.f32 %v315, %v389
      %391 = vdwg.mxu0
      %v392 = vmax.f32 %v388, 0.0
      %v393 = vmax.f32 %v390, 0.0
      %v394 = vlaneseq
      %v395 = vand.u32 %v394, 127
      %v396 = vadd.s32 %v395, 128
      %v397 = vcvt.s32.f32 %v395
      %v398 = vcvt.s32.f32 %v396
      %399 = vrot.lane.b32.xlu0 %v397, 1
      %v400 = vpop.permute.xlu0 %399
      %401 = vrot.lane.b32.xlu0 %v398, 1
      %v402 = vpop.permute.xlu0 %401
      %vm403 = vcmp.lt.s32.totalorder %v395, 1
      %v404 = vsel %vm403, %v400, %v402
      %v405 = vsel %vm403, %v402, %v400
      %vm406 = vcmp.eq.s32.totalorder %v395, 0
      %vm407 = vcmp.eq.s32.totalorder %v396, 0
      %v408 = vsub.s32 %v395, 1
      %v409 = vsub.s32 %v396, 1
      %v410 = vsel %vm406, 255, %v408
      %v411 = vsel %vm407, 255, %v409
      %v412 = vcvt.s32.f32 %v410
      %v413 = vcvt.s32.f32 %v411
      %vm414 = vcmp.eq.f32.partialorder %v405, %v412
      %vm415 = vcmp.eq.f32.partialorder %v404, %v413
      %416 = vrot.lane.b32.xlu0 %v392, 1
      %v417 = vpop.permute.xlu0 %416
      %418 = vrot.lane.b32.xlu0 %v393, 1
      %v419 = vpop.permute.xlu0 %418
      %v420 = vsel %vm403, %v417, %v419
      %v421 = vsel %vm403, %v419, %v417
      %422 = vrot.lane.b32.xlu0 %v392, 127
      %v423 = vpop.permute.xlu0 %422
      %424 = vrot.lane.b32.xlu0 %v393, 127
      %v425 = vpop.permute.xlu0 %424
      %vm426 = vcmp.lt.s32.totalorder %v395, 127
      %v427 = vsel %vm426, %v423, %v425
      %v428 = vsel %vm426, %v425, %v423
      %v429 = vsel %vm414, 1, 0
      %v430 = vsel %vm415, 1, 0
      %v431 = vlaneseq
      %v432 = vshrl.u32 %v431, 7
      %v433 = vsub.s32 0, %v432
      %v434 = vrot.slane %v429, %v433
      %v435 = vlaneseq
      %v436 = vshrl.u32 %v435, 7
      %v437 = vsub.s32 0, %v436
      %v438 = vrot.slane %v430, %v437
      %vm439 = vcmp.eq.s32.totalorder %v434, 1
      %vm440 = vcmp.eq.s32.totalorder %v438, 1
      %v441 = vsel %vm439, %v421, %v427
      %v442 = vsel %vm440, %v420, %v428
      %v443 = vld [vmem:[%s7] sm:$0x3]
      %v445 = vlaneseq
      %v446 = vshrl.u32 %v445, 7
      %v447 = vsub.s32 0, %v446
      %v448 = vrot.slane %v443, %v447
      %v449 = vlaneseq
      %v450 = vshrl.u32 %v449, 7
      %v451 = vsub.s32 1, %v450
      %v452 = vrot.slane %v443, %v451
      %v455 = vmul.f32 %v441, %v448
      %v456 = vmul.f32 %v442, %v452
      %v457 = vsel %vm439, %v427, %v421
      %v458 = vsel %vm440, %v428, %v420
      %s459 = scalar_lea.vmem %s7, 2
      %v460 = vld [vmem:[%s459] sm:$0x3]
      %v462 = vlaneseq
      %v463 = vshrl.u32 %v462, 7
      %v464 = vsub.s32 0, %v463
      %v465 = vrot.slane %v460, %v464
      %v466 = vlaneseq
      %v467 = vshrl.u32 %v466, 7
      %v468 = vsub.s32 1, %v467
      %v469 = vrot.slane %v460, %v468
      %v472 = vmul.f32 %v457, %v465
      %v473 = vmul.f32 %v458, %v469
      %v474 = vld [vmem:[%s3] sm:$0xff]
      %476 = vset.pattern.permute.xlu0 0
      %477 = vperm.xlu0 %476, %v474
      %v478 = vpop.permute.xlu0 %477
      %v480 = vmul.f32 %v478, %v455
      %v481 = vmul.f32 %v478, %v456
      %s482 = scalar_lea.vmem %s3, 8
      %v483 = vld [vmem:[%s482] sm:$0xff]
      %485 = vset.pattern.permute.xlu0 0
      %486 = vperm.xlu0 %485, %v483
      %v487 = vpop.permute.xlu0 %486
      %v489 = vmul.f32 %v487, %v392
      %v490 = vmul.f32 %v487, %v393
      %v491 = vadd.f32 %v480, %v489
      %v492 = vadd.f32 %v481, %v490
      %s493 = scalar_lea.vmem %s3, 16
      %v494 = vld [vmem:[%s493] sm:$0xff]
      %496 = vset.pattern.permute.xlu0 0
      %497 = vperm.xlu0 %496, %v494
      %v498 = vpop.permute.xlu0 %497
      %v500 = vmul.f32 %v498, %v472
      %v501 = vmul.f32 %v498, %v473
      %v502 = vadd.f32 %v491, %v500
      %v503 = vadd.f32 %v492, %v501
      %504 = vrot.lane.b32.xlu0 %v502, 16
      %v505 = vpop.permute.xlu0 %504
      %506 = vrot.lane.b32.xlu0 %v503, 16
      %v507 = vpop.permute.xlu0 %506
      %vm508 = vcmp.lt.s32.totalorder %v395, 16
      %v509 = vsel %vm508, %v505, %v507
      %v510 = vsel %vm508, %v507, %v505
      %511 = vrot.lane.b32.xlu0 %v502, 112
      %v512 = vpop.permute.xlu0 %511
      %513 = vrot.lane.b32.xlu0 %v503, 112
      %v514 = vpop.permute.xlu0 %513
      %vm515 = vcmp.lt.s32.totalorder %v395, 112
      %v516 = vsel %vm515, %v512, %v514
      %v517 = vsel %vm515, %v514, %v512
      %v518 = vsel %vm439, %v510, %v516
      %v519 = vsel %vm440, %v509, %v517
      %s520 = scalar_lea.vmem %s7, 4
      %v521 = vld [vmem:[%s520] sm:$0x3]
      %v523 = vlaneseq
      %v524 = vshrl.u32 %v523, 7
      %v525 = vsub.s32 0, %v524
      %v526 = vrot.slane %v521, %v525
      %v527 = vlaneseq
      %v528 = vshrl.u32 %v527, 7
      %v529 = vsub.s32 1, %v528
      %v530 = vrot.slane %v521, %v529
      %v533 = vmul.f32 %v518, %v526
      %v534 = vmul.f32 %v519, %v530
      %v535 = vadd.f32 %v533, 0.0
      %v536 = vadd.f32 %v534, 0.0
      %s537 = scalar_lea.vmem %s3, 24
      %v538 = vld [vmem:[%s537] sm:$0xff]
      %540 = vset.pattern.permute.xlu0 0
      %541 = vperm.xlu0 %540, %v538
      %v542 = vpop.permute.xlu0 %541
      %v544 = vmul.f32 %v542, %v455
      %v545 = vmul.f32 %v542, %v456
      %s546 = scalar_lea.vmem %s3, 32
      %v547 = vld [vmem:[%s546] sm:$0xff]
      %549 = vset.pattern.permute.xlu0 0
      %550 = vperm.xlu0 %549, %v547
      %v551 = vpop.permute.xlu0 %550
      %v553 = vmul.f32 %v551, %v392
      %v554 = vmul.f32 %v551, %v393
      %v555 = vadd.f32 %v544, %v553
      %v556 = vadd.f32 %v545, %v554
      %s557 = scalar_lea.vmem %s3, 40
      %v558 = vld [vmem:[%s557] sm:$0xff]
      %560 = vset.pattern.permute.xlu0 0
      %561 = vperm.xlu0 %560, %v558
      %v562 = vpop.permute.xlu0 %561
      %v564 = vmul.f32 %v562, %v472
      %v565 = vmul.f32 %v562, %v473
      %v566 = vadd.f32 %v555, %v564
      %v567 = vadd.f32 %v556, %v565
      %v568 = vadd.f32 %v535, %v566
      %v569 = vadd.f32 %v536, %v567
      %s570 = scalar_lea.vmem %s3, 48
      %v571 = vld [vmem:[%s570] sm:$0xff]
      %573 = vset.pattern.permute.xlu0 0
      %574 = vperm.xlu0 %573, %v571
      %v575 = vpop.permute.xlu0 %574
      %v577 = vmul.f32 %v575, %v455
      %v578 = vmul.f32 %v575, %v456
      %s579 = scalar_lea.vmem %s3, 56
      %v580 = vld [vmem:[%s579] sm:$0xff]
      %582 = vset.pattern.permute.xlu0 0
      %583 = vperm.xlu0 %582, %v580
      %v584 = vpop.permute.xlu0 %583
      %v586 = vmul.f32 %v584, %v392
      %v587 = vmul.f32 %v584, %v393
      %v588 = vadd.f32 %v577, %v586
      %v589 = vadd.f32 %v578, %v587
      %s590 = scalar_lea.vmem %s3, 64
      %v591 = vld [vmem:[%s590] sm:$0xff]
      %593 = vset.pattern.permute.xlu0 0
      %594 = vperm.xlu0 %593, %v591
      %v595 = vpop.permute.xlu0 %594
      %v597 = vmul.f32 %v595, %v472
      %v598 = vmul.f32 %v595, %v473
      %v599 = vadd.f32 %v588, %v597
      %v600 = vadd.f32 %v589, %v598
      %601 = vrot.lane.b32.xlu0 %v599, 112
      %v602 = vpop.permute.xlu0 %601
      %603 = vrot.lane.b32.xlu0 %v600, 112
      %v604 = vpop.permute.xlu0 %603
      %v605 = vsel %vm515, %v602, %v604
      %v606 = vsel %vm515, %v604, %v602
      %607 = vrot.lane.b32.xlu0 %v599, 16
      %v608 = vpop.permute.xlu0 %607
      %609 = vrot.lane.b32.xlu0 %v600, 16
      %v610 = vpop.permute.xlu0 %609
      %v611 = vsel %vm508, %v608, %v610
      %v612 = vsel %vm508, %v610, %v608
      %v613 = vsel %vm439, %v605, %v612
      %v614 = vsel %vm440, %v606, %v611
      %s615 = scalar_lea.vmem %s7, 6
      %v616 = vld [vmem:[%s615] sm:$0x3]
      %v618 = vlaneseq
      %v619 = vshrl.u32 %v618, 7
      %v620 = vsub.s32 0, %v619
      %v621 = vrot.slane %v616, %v620
      %v622 = vlaneseq
      %v623 = vshrl.u32 %v622, 7
      %v624 = vsub.s32 1, %v623
      %v625 = vrot.slane %v616, %v624
      %v628 = vmul.f32 %v613, %v621
      %v629 = vmul.f32 %v614, %v625
      %v630 = vadd.f32 %v568, %v628
      %v631 = vadd.f32 %v569, %v629
      %v632 = vld [vmem:[%s4] sm:$0xff]
      %634 = vset.pattern.permute.xlu0 0
      %635 = vperm.xlu0 %634, %v632
      %v636 = vpop.permute.xlu0 %635
      %v638 = vadd.f32 %v630, %v636
      %v639 = vadd.f32 %v631, %v636
      %v640 = vld [vmem:[%s5] sm:$0xff]
      %v641 = vld [vmem:[%s5 + $0x8] sm:$0xff]
      %v642 = vld [vmem:[%s5 + $0x10] sm:$0xff]
      %v643 = vld [vmem:[%s5 + $0x18] sm:$0xff]
      %v644 = vld [vmem:[%s6] sm:$0xff]
      %v645 = vld [vmem:[%s6 + $0x8] sm:$0xff]
      %v646 = vld [vmem:[%s6 + $0x10] sm:$0xff]
      %v647 = vld [vmem:[%s6 + $0x18] sm:$0xff]
      %649 = vset.pattern.permute.xlu0 0
      %650 = vperm.xlu0 %649, %v644
      %v651 = vpop.permute.xlu0 %650
      %654 = vset.pattern.permute.xlu0 0
      %655 = vperm.xlu0 %654, %v645
      %v656 = vpop.permute.xlu0 %655
      %659 = vset.pattern.permute.xlu0 0
      %660 = vperm.xlu0 %659, %v646
      %v661 = vpop.permute.xlu0 %660
      %664 = vset.pattern.permute.xlu0 0
      %665 = vperm.xlu0 %664, %v647
      %v666 = vpop.permute.xlu0 %665
      %vm668 = vcmask 64512
      %v670 = vsel %vm668, %v640, 0
      %v673 = vsel %vm668, %v641, 0
      %v676 = vsel %vm668, %v642, 0
      %v679 = vsel %vm668, %v643, 0
      %681 = vmatprep.subr.mxu0 %v639
      %682 = vmatpush1.msra.mxu0 %v638
      %683 = vmatprep.subr.mxu0 0.0
      %684 = vmatpush1.msra.mxu0 0.0
      %685 = vmatprep.subr.mxu0 0.0
      %686 = vmatpush1.msra.mxu0 0.0
      %687 = vmatprep.subr.mxu0 0.0
      %688 = vmatpush1.msra.mxu0 0.0
      %689 = vmatprep.subr.mxu0 0.0
      %690 = vmatpush1.msra.mxu0 0.0
      %691 = vmatprep.subr.mxu0 0.0
      %692 = vmatpush1.msra.mxu0 0.0
      %693 = vmatprep.subr.mxu0 0.0
      %694 = vmatpush1.msra.mxu0 0.0
      %695 = vmatprep.subr.mxu0 0.0
      %696 = vmatpush1.msra.mxu0 0.0
      %697 = vmatprep.subr.mxu0 0.0
      %698 = vmatpush1.msra.mxu0 0.0
      %699 = vmatprep.subr.mxu0 0.0
      %700 = vmatpush1.msra.mxu0 0.0
      %701 = vmatprep.subr.mxu0 0.0
      %702 = vmatpush1.msra.mxu0 0.0
      %703 = vmatprep.subr.mxu0 0.0
      %704 = vmatpush1.msra.mxu0 0.0
      %705 = vmatprep.subr.mxu0 0.0
      %706 = vmatpush1.msra.mxu0 0.0
      %707 = vmatprep.subr.mxu0 0.0
      %708 = vmatpush1.msra.mxu0 0.0
      %709 = vmatprep.subr.mxu0 0.0
      %710 = vmatpush1.msra.mxu0 0.0
      %711 = vmatprep.subr.mxu0 0.0
      %712 = vmatpush1.msra.mxu0 0.0
      %713 = vmatprep.subr.mxu0 0.0
      %714 = vmatpush1.msra.mxu0 0.0
      %715 = vmatprep.subr.mxu0 0.0
      %716 = vmatpush1.msra.mxu0 0.0
      %717 = vmatprep.subr.mxu0 0.0
      %718 = vmatpush1.msra.mxu0 0.0
      %719 = vmatprep.subr.mxu0 0.0
      %720 = vmatpush1.msra.mxu0 0.0
      %721 = vmatprep.subr.mxu0 0.0
      %722 = vmatpush1.msra.mxu0 0.0
      %723 = vmatprep.subr.mxu0 0.0
      %724 = vmatpush1.msra.mxu0 0.0
      %725 = vmatprep.subr.mxu0 0.0
      %726 = vmatpush1.msra.mxu0 0.0
      %727 = vmatprep.subr.mxu0 0.0
      %728 = vmatpush1.msra.mxu0 0.0
      %729 = vmatprep.subr.mxu0 0.0
      %730 = vmatpush1.msra.mxu0 0.0
      %731 = vmatprep.subr.mxu0 0.0
      %732 = vmatpush1.msra.mxu0 0.0
      %733 = vmatprep.subr.mxu0 0.0
      %734 = vmatpush1.msra.mxu0 0.0
      %735 = vmatprep.subr.mxu0 0.0
      %736 = vmatpush1.msra.mxu0 0.0
      %737 = vmatprep.subr.mxu0 0.0
      %738 = vmatpush1.msra.mxu0 0.0
      %739 = vmatprep.subr.mxu0 0.0
      %740 = vmatpush1.msra.mxu0 0.0
      %741 = vmatprep.subr.mxu0 0.0
      %742 = vmatpush1.msra.mxu0 0.0
      %743 = vmatprep.subr.mxu0 0.0
      %744 = vmatpush1.msra.mxu0 0.0
      %745 = vmatprep.mubr.f32.mxu0 0.0
      %746 = vmatmul.mubr.f32.gmra.mrb[0].mxu0 %v670
      %v747 = vpop.f32.mrb[0].mxu0
      %v748 = vadd.f32 %v651, %v747
      %v749 = vpop.f32.mrb[0].mxu0
      %v750 = vadd.f32 %v651, %v749
      %751 = vmatprep.mubr.f32.mxu0 0.0
      %752 = vmatmul.mubr.f32.gmra.mrb[0].mxu0 %v673
      %v753 = vpop.f32.mrb[0].mxu0
      %v754 = vadd.f32 %v656, %v753
      %v755 = vpop.f32.mrb[0].mxu0
      %v756 = vadd.f32 %v656, %v755
      %757 = vmatprep.mubr.f32.mxu0 0.0
      %758 = vmatmul.mubr.f32.gmra.mrb[0].mxu0 %v676
      %v759 = vpop.f32.mrb[0].mxu0
      %v760 = vadd.f32 %v661, %v759
      %v761 = vpop.f32.mrb[0].mxu0
      %v762 = vadd.f32 %v661, %v761
      %763 = vmatprep.mubr.f32.mxu0 0.0
      %764 = vmatmul.mubr.f32.gmra.mrb[0].mxu0 %v679
      %v765 = vpop.f32.mrb[0].mxu0
      %v766 = vadd.f32 %v666, %v765
      %v767 = vpop.f32.mrb[0].mxu0
      %v768 = vadd.f32 %v666, %v767
      %769 = vdwg.mxu0
      %v770 = vmax.f32 %v748, 0.0
      %v771 = vmax.f32 %v750, 0.0
      %v772 = vmax.f32 %v754, 0.0
      %v773 = vmax.f32 %v756, 0.0
      %v774 = vmax.f32 %v760, 0.0
      %v775 = vmax.f32 %v762, 0.0
      %v776 = vmax.f32 %v766, 0.0
      %v777 = vmax.f32 %v768, 0.0
      %778 = vst [vmem:[%s305] sm:$0xff] %v770
      %779 = vst [vmem:[%s305 + $0x8] sm:$0xff] %v771
      %780 = vst [vmem:[%s305 + $0x10] sm:$0xff] %v772
      %781 = vst [vmem:[%s305 + $0x18] sm:$0xff] %v773
      %782 = vst [vmem:[%s305 + $0x20] sm:$0xff] %v774
      %783 = vst [vmem:[%s305 + $0x28] sm:$0xff] %v775
      %784 = vst [vmem:[%s305 + $0x30] sm:$0xff] %v776
      %785 = vst [vmem:[%s305 + $0x38] sm:$0xff] %v777
      %p786 = scmp.lt.s32.totalorder %s19, 1
      %s787 = scalar_select %p786, %s19, 1
      %s788 = smul.addr %s787, 8
      %s789 = smul.addr %s788, 8
      %s790 = scalar_lea.vmem %s8, %s789
      // Predicated region
      $region53: #{shufflenet_unit_forward.1} parent=51 // pred_check
        %p791 = pneg %p210
      $region54: #{shufflenet_unit_forward.1} parent=51 // pred_check_branch
        %793 = sbr.rel (%p791) target = $region56
      $region55: #{shufflenet_unit_forward.1} parent=51 // pred_region
        _
      $region56: #{shufflenet_unit_forward.1} parent=51 // pred_fallthru
        _
    $region52: #{shufflenet_unit_forward.1} parent=5 // pred_fallthru
      _
    %p794 = scmp.le.s32.totalorder 2, %s14
    // Predicated region
    $region57: #{shufflenet_unit_forward.1} parent=5 // pred_check
      %p795 = pneg %p794
    $region58: #{shufflenet_unit_forward.1} parent=5 // pred_check_branch
      %797 = sbr.rel (%p795) target = $region60
    $region59: #{shufflenet_unit_forward.1} parent=5 // pred_region
      %s798 = ssub.s32 %s14, 2
      // Predicated region
      $region61: #{shufflenet_unit_forward.1} parent=59 // pred_check
        %p799 = pneg %p216
      $region62: #{shufflenet_unit_forward.1} parent=59 // pred_check_branch
        %801 = sbr.rel (%p799) target = $region64
      $region63: #{shufflenet_unit_forward.1} parent=59 // pred_region
        %p802 = scmp.lt.s32.totalorder %s20, 1
        %s803 = scalar_select %p802, %s20, 1
        %s804 = smul.addr %s803, 8
        %s805 = smul.addr %s804, 8
        %s806 = scalar_lea.vmem %s8, %s805
      $region64: #{shufflenet_unit_forward.1} parent=59 // pred_fallthru
        _
    $region60: #{shufflenet_unit_forward.1} parent=5 // pred_fallthru
      _
  $region6: #{shufflenet_unit_forward.1} parent=0 // loop_footer
    %s18 = sadd.s32 1, %s14
  $region7: #{shufflenet_unit_forward.1} parent=0 // loop_footer_branch
    %13 = sbr.rel target = $region3
  $region8: #{shufflenet_unit_forward.1} parent=0 // loop_exit
    _

</llo_original>
